<compile_context>
chip_gen: v5e
topology: v5e:2x2
jax: 0.10.0
libtpu: 0.0.40
codegen_flags: <defaults>
</compile_context>

<pallas_src>
import functools

import numpy as np
import jax
import jax.numpy as jnp
from jax.experimental import pallas as pl
from jax.experimental.pallas import tpu as pltpu

ALPHA = 0.2  # opt.alpha from Config


# ---------------------------------------------------------------------------
# Small helpers
# ---------------------------------------------------------------------------
def _round_up(x, m):
    return ((x + m - 1) // m) * m


def _round_down(x, m):
    return (x // m) * m


def _tpu_info():
    try:
        return pltpu.get_tpu_info()
    except Exception:
        return None


def _vmem_capacity_bytes():
    info = _tpu_info()
    cap = getattr(info, "vmem_capacity_bytes", None) if info is not None else None
    if isinstance(cap, (int, np.integer)) and int(cap) > 0:
        return int(cap)
    return 64 << 20   # conservative default (v7x has 64 MiB/TC; v5e/v6e 128 MiB)


def _num_tensorcores():
    """Best-effort TensorCores-per-chip detection; always safe to return 1."""
    info = _tpu_info()
    if info is not None:
        for name in ("num_cores", "core_count", "num_tensorcores",
                     "tensorcore_count", "cores_per_chip"):
            v = getattr(info, name, None)
            if isinstance(v, (int, np.integer)) and 1 <= int(v) <= 8:
                return min(int(v), 2)
    try:
        kind = jax.devices()[0].device_kind.lower()
        if any(s in kind for s in ("v7", "7x", "v5p", "v4")):
            return 2
    except Exception:
        pass
    return 1


def _vmem_budgets():
    cap = _vmem_capacity_bytes()
    pick_budget = min((cap * 3) // 8, 48 << 20)   # ~24 MiB on 64 MiB parts, 48 MiB on 128 MiB
    limit_cap = min((cap * 5) // 8, 64 << 20)     # ~40 MiB on v7x, 64 MiB on v5e/v6e
    return pick_budget, limit_cap


_SUBLANE = {4: 8, 2: 16, 1: 32}   # native sublane tile per itemsize


def _pick_tile_m(M, N, itemsizes, budget_bytes, max_tile_m=None):
    """Largest row tile (<=512, sublane-aligned) fitting the VMEM pick budget."""
    n_vmem = _round_up(max(N, 1), 128)
    align = max(_SUBLANE.get(int(sz), 8) for sz in itemsizes)
    if M < align:
        return M                                   # single full-extent block (rule waived)
    cap = min(512, _round_down(M, align))
    if max_tile_m is not None:
        cap = min(cap, max(align, _round_down(int(max_tile_m), align)))
    tile_m = max(cap, align)

    def per_step(tm):
        b = sum(2 * tm * n_vmem * sz for sz in itemsizes)   # double-buffered inputs
        b += 8 * n_vmem * 4                                  # resident partial output
        b += 2 * tm * n_vmem * 4                             # elementwise temporaries
        return b

    while tile_m > align and per_step(tile_m) > budget_bytes:
        tile_m = max(align, _round_down(tile_m // 2, align))
    return tile_m


def _vmem_limit_bytes(N, tile_m, itemsizes, limit_cap):
    n_vmem = _round_up(max(N, 1), 128)
    needed = sum(2 * tile_m * n_vmem * sz for sz in itemsizes)
    needed += 8 * n_vmem * 4 + 2 * tile_m * n_vmem * 4 + (2 << 20)
    return int(min(limit_cap, max(2 * needed, 32 << 20)))


# ---------------------------------------------------------------------------
# Kernels
# ---------------------------------------------------------------------------
def _rowgroup_sum(x, tile_m):
    """(tile_m, N) -> (8, N) using only sublane-tile-aligned slices and
    vreg-to-vreg VPU adds (log-depth tree, no reshape / cross-lane work)."""
    parts = [x[g * 8:(g + 1) * 8, :] for g in range(tile_m // 8)]
    while len(parts) > 1:
        nxt = [parts[a] + parts[a + 1] for a in range(0, len(parts) - 1, 2)]
        if len(parts) % 2:
            nxt.append(parts[-1])
        parts = nxt
    return parts[0]


def _accumulate_rows(contrib, out_ref, *, m_total, tile_m, tiles_per_split):
    """Fold one (tile_m, N) contribution into the resident (8|1, N) partial."""
    i = pl.program_id(1)

    @pl.when(i == 0)
    def _init():
        out_ref[...] = jnp.zeros_like(out_ref)

    # Row mask for the ragged last tile and for clamped overshoot blocks.
    # Use a select (not a multiply) so stale VMEM data cannot poison the sum.
    row0 = (pl.program_id(0) * tiles_per_split + i) * tile_m
    rows = jax.lax.broadcasted_iota(jnp.int32, (tile_m, 1), 0) + row0
    contrib = jnp.where(rows < m_total, contrib, 0.0)

    if tile_m % 8 == 0:
        part = _rowgroup_sum(contrib, tile_m)          # (8, N)
    else:  # tiny-M fallback (single full-extent block)
        part = jnp.sum(contrib, axis=0, keepdims=True)  # (1, N)
    out_ref[...] += part


def _fused_kernel(inp_ref, tgt_ref, out_ref, *, alpha, m_total, tile_m,
                  tiles_per_split):
    """Fast path: weight folded in-kernel, w = alpha + (1-2*alpha)*target."""
    x = inp_ref[...].astype(jnp.float32)
    t = tgt_ref[...].astype(jnp.float32)
    d = x - t
    w = alpha + (1.0 - 2.0 * alpha) * t
    _accumulate_rows(w * d * d, out_ref, m_total=m_total, tile_m=tile_m,
                     tiles_per_split=tiles_per_split)


def _weighted_kernel(w_ref, inp_ref, tgt_ref, out_ref, *, m_total, tile_m,
                     tiles_per_split):
    """General path: explicit per-element weight matrix (repeat-safe)."""
    x = inp_ref[...].astype(jnp.float32)
    t = tgt_ref[...].astype(jnp.float32)
    d = x - t
    w = w_ref[...].astype(jnp.float32)
    _accumulate_rows(w * d * d, out_ref, m_total=m_total, tile_m=tile_m,
                     tiles_per_split=tiles_per_split)


# ---------------------------------------------------------------------------
# pallas_call driver
# ---------------------------------------------------------------------------
def _run_reduction(kernel, operands, M, N, tile_m, n_splits, vmem_limit):
    n_tiles = pl.cdiv(M, tile_m)
    n_splits = max(1, min(int(n_splits), n_tiles))
    tiles_per_split = pl.cdiv(n_tiles, n_splits)
    acc_rows = 8 if tile_m % 8 == 0 else 1

    def row_map(c, i):
        # Clamp so an overshoot step (n_tiles not divisible by n_splits) just
        # re-reads the last real block; its rows are masked in-kernel.
        return (jnp.minimum(c * tiles_per_split + i, n_tiles - 1), 0)

    kern = functools.partial(kernel, m_total=M, tile_m=tile_m,
                             tiles_per_split=tiles_per_split)

    partials = pl.pallas_call(
        kern,
        out_shape=jax.ShapeDtypeStruct((n_splits * acc_rows, N), jnp.float32),
        grid_spec=pltpu.PrefetchScalarGridSpec(
            num_scalar_prefetch=0,
            grid=(n_splits, tiles_per_split),
            in_specs=[pl.BlockSpec((tile_m, N), row_map) for _ in operands],
            out_specs=pl.BlockSpec((acc_rows, N), lambda c, i: (c, 0)),
        ),
        compiler_params=pltpu.CompilerParams(
            dimension_semantics=("parallel", "arbitrary"),
            vmem_limit_bytes=vmem_limit,
        ),
    )(*operands)
    # Tiny cross-partial reduce (<= 16 x N elements) done by XLA.
    return jnp.sum(partials)


# ---------------------------------------------------------------------------
# Public wrapper (mirrors Myloss.forward)
# ---------------------------------------------------------------------------
def myloss(one_index, zero_index, target, inp, alpha=ALPHA,
           indices_partition_target=True, max_tile_m=None, num_splits=None):
    """Reproduces Myloss.forward(one_index, zero_index, target, input).

    one_index / zero_index: (2, K) int arrays of (row, col) indices.
    target / input: (M, N) matrices (any float dtype; upcast in-kernel).
    indices_partition_target: True (default) when one_index/zero_index are
      exactly the positions of target==1 / target==0 with no repeats (the
      NIMCGCN training case) -> fused in-kernel weight, two input streams.
      A static element-count check demotes to the general path if the index
      counts cannot possibly cover the matrix exactly once.
    """
    target = jnp.asarray(target)
    inp = jnp.asarray(inp)
    one_index = jnp.asarray(one_index)
    zero_index = jnp.asarray(zero_index)
    M, N = inp.shape
    alpha = float(alpha)

    if indices_partition_target:
        k = int(one_index.shape[-1]) + int(zero_index.shape[-1])
        if k != M * N:            # cheap static sanity check; repeats not detectable
            indices_partition_target = False

    pick_budget, limit_cap = _vmem_budgets()
    n_splits = _num_tensorcores() if num_splits is None else int(num_splits)

    if indices_partition_target:
        # Streams stay in their native dtypes (target is binary -> callers can
        # keep it bf16/int8 for half/quarter HBM traffic); kernel upcasts.
        operands = (inp, target)
        itemsizes = [op.dtype.itemsize for op in operands]
        tile_m = _pick_tile_m(M, N, itemsizes, pick_budget, max_tile_m)
        vmem_limit = _vmem_limit_bytes(N, tile_m, itemsizes, limit_cap)
        kernel = functools.partial(_fused_kernel, alpha=alpha)
        return _run_reduction(kernel, operands, M, N, tile_m, n_splits, vmem_limit)

    # General fallback: explicit f32 weight via scatter-add (exact repeated-
    # index semantics; kept f32 so repeat counts never lose precision).
    weight = jnp.zeros((M, N), jnp.float32)
    weight = weight.at[one_index[0], one_index[1]].add(1.0 - alpha)
    weight = weight.at[zero_index[0], zero_index[1]].add(alpha)
    operands = (weight, inp, target)
    itemsizes = [op.dtype.itemsize for op in operands]
    tile_m = _pick_tile_m(M, N, itemsizes, pick_budget, max_tile_m)
    vmem_limit = _vmem_limit_bytes(N, tile_m, itemsizes, limit_cap)
    return _run_reduction(_weighted_kernel, operands, M, N, tile_m, n_splits,
                          vmem_limit)


# ---------------------------------------------------------------------------
# Demo / self-test
# ---------------------------------------------------------------------------
if __name__ == "__main__":
    # Small shapes that are NOT multiples of (8,128): exercises the ragged
    # last row tile and the full-N (unpadded) column block.
    M, N = 72, 200
    key = jax.random.PRNGKey(0)
    k1, k2 = jax.random.split(key)

    # Binary association matrix kept in bf16 (exact for 0/1) and an f32 pred.
    target = (jax.random.uniform(k1, (M, N)) < 0.1).astype(jnp.bfloat16)
    pred = jax.random.uniform(k2, (M, N), dtype=jnp.float32)

    tgt_np = np.asarray(target, dtype=np.float32)
    one_rows, one_cols = np.nonzero(tgt_np == 1.0)
    zero_rows, zero_cols = np.nonzero(tgt_np == 0.0)
    one_index = jnp.asarray(np.stack([one_rows, one_cols]), dtype=jnp.int32)
    zero_index = jnp.asarray(np.stack([zero_rows, zero_cols]), dtype=jnp.int32)

    # 1) Fast path, default tiling (single tile on these small shapes).
    loss_fast = jax.block_until_ready(
        myloss(one_index, zero_index, target, pred))
    # 2) Fast path with forced small tiles + 2-way core split: exercises the
    #    multi-tile accumulation, the ragged last tile, the clamped overshoot
    #    block and the leading "parallel" axis (runs sequentially on 1-TC chips).
    loss_split = jax.block_until_ready(
        myloss(one_index, zero_index, target, pred, max_tile_m=16, num_splits=2))
    # 3) General scatter-weight fallback.
    loss_gen = jax.block_until_ready(
        myloss(one_index, zero_index, target, pred,
               indices_partition_target=False))

    # Pure-numpy reference (float64 gold).
    pred_np = np.asarray(pred, dtype=np.float64)
    sq = (pred_np - tgt_np.astype(np.float64)) ** 2
    ref = (1.0 - ALPHA) * sq[np.asarray(one_index[0]), np.asarray(one_index[1])].sum() \
        + ALPHA * sq[np.asarray(zero_index[0]), np.asarray(zero_index[1])].sum()

    for name, got in (("fast", loss_fast), ("split", loss_split),
                      ("general", loss_gen)):
        assert np.allclose(np.asarray(got, dtype=np.float64), ref,
                           rtol=1e-4, atol=1e-2), (name, float(got), float(ref))

    print("KERNEL_OK")
</pallas_src>

<mosaic_0001>
module attributes {stable_mosaic.version = 11 : i64} {
  func.func @_fused_kernel(%arg0: i32, %arg1: i32, %arg2: memref<64x200xf32, #tpu.memory_space<vmem>>, %arg3: memref<64x200xbf16, #tpu.memory_space<vmem>>, %arg4: memref<8x200xf32, #tpu.memory_space<vmem>>) attributes {dimension_semantics = [#tpu.dimension_semantics<parallel>, #tpu.dimension_semantics<arbitrary>], iteration_bounds = array<i64: 1, 2>, scalar_prefetch = 0 : i64, scratch_operands = 0 : i64, tpu.core_type = #tpu.core_type<tc>, window_params = [{transform_indices = @transform_0, window_bounds = array<i64: 64, 200>}, {transform_indices = @transform_1, window_bounds = array<i64: 64, 200>}, {transform_indices = @transform_2, window_bounds = array<i64: 8, 200>}]} {
    %c0 = arith.constant 0 : index
    %c0_0 = arith.constant 0 : index
    %0 = vector.load %arg2[%c0, %c0_0] : memref<64x200xf32, #tpu.memory_space<vmem>>, vector<64x200xf32>
    %c0_1 = arith.constant 0 : index
    %c0_2 = arith.constant 0 : index
    %1 = vector.load %arg3[%c0_1, %c0_2] : memref<64x200xbf16, #tpu.memory_space<vmem>>, vector<64x200xbf16>
    %2 = arith.extf %1 : vector<64x200xbf16> to vector<64x200xf32>
    %3 = arith.subf %0, %2 : vector<64x200xf32>
    %cst = arith.constant 6.000000e-01 : f32
    %4 = vector.broadcast %cst : f32 to vector<64x200xf32>
    %5 = arith.mulf %4, %2 : vector<64x200xf32>
    %cst_3 = arith.constant 2.000000e-01 : f32
    %6 = vector.broadcast %cst_3 : f32 to vector<64x200xf32>
    %7 = arith.addf %6, %5 : vector<64x200xf32>
    %8 = arith.mulf %7, %3 : vector<64x200xf32>
    %9 = arith.mulf %8, %3 : vector<64x200xf32>
    %c0_i32 = arith.constant 0 : i32
    %10 = arith.cmpi eq, %arg1, %c0_i32 : i32
    %11 = arith.extui %10 : i1 to i32
    %c0_i32_4 = arith.constant 0 : i32
    %12 = arith.cmpi ne, %11, %c0_i32_4 : i32
    scf.if %12 {
      %cst_10 = arith.constant 0.000000e+00 : f32
      %43 = vector.broadcast %cst_10 : f32 to vector<8x200xf32>
      %c0_11 = arith.constant 0 : index
      %c0_12 = arith.constant 0 : index
      %44 = vector.load %arg4[%c0_11, %c0_12] : memref<8x200xf32, #tpu.memory_space<vmem>>, vector<8x200xf32>
      tpu.vector_store %arg4[%c0_11, %c0_12], %43 {strides = array<i32>} : memref<8x200xf32, #tpu.memory_space<vmem>>, vector<8x200xf32>,
    } else {
    }
    %c2_i32 = arith.constant 2 : i32
    %13 = arith.muli %arg0, %c2_i32 : i32
    %14 = arith.addi %13, %arg1 : i32
    %c64_i32 = arith.constant 64 : i32
    %15 = arith.muli %14, %c64_i32 : i32
    %16 = tpu.iota {dimensions = array<i32: 0>} : vector<64x1xi32>
    %17 = vector.broadcast %15 : i32 to vector<64x1xi32>
    %18 = arith.addi %16, %17 : vector<64x1xi32>
    %c72_i32 = arith.constant 72 : i32
    %19 = vector.broadcast %c72_i32 : i32 to vector<64x1xi32>
    %20 = arith.cmpi slt, %18, %19 : vector<64x1xi32>
    %cst_5 = arith.constant 0.000000e+00 : f32
    %21 = vector.shape_cast %20 : vector<64x1xi1> to vector<64x1xi1>
    %22 = vector.broadcast %21 : vector<64x1xi1> to vector<64x200xi1>
    %23 = vector.broadcast %cst_5 : f32 to vector<64x200xf32>
    %24 = arith.select %22, %9, %23 : vector<64x200xi1>, vector<64x200xf32>
    %25 = vector.extract_strided_slice %24 {offsets = [0, 0], sizes = [8, 200], strides = [1, 1]} : vector<64x200xf32> to vector<8x200xf32>
    %26 = vector.extract_strided_slice %24 {offsets = [8, 0], sizes = [8, 200], strides = [1, 1]} : vector<64x200xf32> to vector<8x200xf32>
    %27 = vector.extract_strided_slice %24 {offsets = [16, 0], sizes = [8, 200], strides = [1, 1]} : vector<64x200xf32> to vector<8x200xf32>
    %28 = vector.extract_strided_slice %24 {offsets = [24, 0], sizes = [8, 200], strides = [1, 1]} : vector<64x200xf32> to vector<8x200xf32>
    %29 = vector.extract_strided_slice %24 {offsets = [32, 0], sizes = [8, 200], strides = [1, 1]} : vector<64x200xf32> to vector<8x200xf32>
    %30 = vector.extract_strided_slice %24 {offsets = [40, 0], sizes = [8, 200], strides = [1, 1]} : vector<64x200xf32> to vector<8x200xf32>
    %31 = vector.extract_strided_slice %24 {offsets = [48, 0], sizes = [8, 200], strides = [1, 1]} : vector<64x200xf32> to vector<8x200xf32>
    %32 = vector.extract_strided_slice %24 {offsets = [56, 0], sizes = [8, 200], strides = [1, 1]} : vector<64x200xf32> to vector<8x200xf32>
    %33 = arith.addf %25, %26 : vector<8x200xf32>
    %34 = arith.addf %27, %28 : vector<8x200xf32>
    %35 = arith.addf %29, %30 : vector<8x200xf32>
    %36 = arith.addf %31, %32 : vector<8x200xf32>
    %37 = arith.addf %33, %34 : vector<8x200xf32>
    %38 = arith.addf %35, %36 : vector<8x200xf32>
    %39 = arith.addf %37, %38 : vector<8x200xf32>
    %c0_6 = arith.constant 0 : index
    %c0_7 = arith.constant 0 : index
    %40 = vector.load %arg4[%c0_6, %c0_7] : memref<8x200xf32, #tpu.memory_space<vmem>>, vector<8x200xf32>
    %41 = arith.addf %40, %39 : vector<8x200xf32>
    %c0_8 = arith.constant 0 : index
    %c0_9 = arith.constant 0 : index
    %42 = vector.load %arg4[%c0_8, %c0_9] : memref<8x200xf32, #tpu.memory_space<vmem>>, vector<8x200xf32>
    tpu.vector_store %arg4[%c0_8, %c0_9], %41 {strides = array<i32>} : memref<8x200xf32, #tpu.memory_space<vmem>>, vector<8x200xf32>,
    return
  }
  func.func @transform_0(%arg0: i32, %arg1: i32) -> (i32, i32) {
    %c2_i32 = arith.constant 2 : i32
    %0 = arith.muli %arg0, %c2_i32 : i32
    %1 = arith.addi %0, %arg1 : i32
    %c1_i32 = arith.constant 1 : i32
    %2 = arith.minsi %1, %c1_i32 : i32
    %c0_i32 = arith.constant 0 : i32
    %c0_i32_0 = arith.constant 0 : i32
    return %2, %c0_i32 : i32, i32
  }
  func.func @transform_1(%arg0: i32, %arg1: i32) -> (i32, i32) {
    %c2_i32 = arith.constant 2 : i32
    %0 = arith.muli %arg0, %c2_i32 : i32
    %1 = arith.addi %0, %arg1 : i32
    %c1_i32 = arith.constant 1 : i32
    %2 = arith.minsi %1, %c1_i32 : i32
    %c0_i32 = arith.constant 0 : i32
    %c0_i32_0 = arith.constant 0 : i32
    return %2, %c0_i32 : i32, i32
  }
  func.func @transform_2(%arg0: i32, %arg1: i32) -> (i32, i32) {
    %c0_i32 = arith.constant 0 : i32
    %c0_i32_0 = arith.constant 0 : i32
    return %arg0, %c0_i32 : i32, i32
  }
}

</mosaic_0001>

<llo_original>
// kernel: tpu_custom_call.1
$region0: #{tpu_custom_call.1}
  #allocation0 [shape = 'u32[]', space=smem, size = 0x4, offset = 0x4, fixed_abs, tag = 'smem constant byte address 0x4 - core index']
  #allocation1 [shape = 'u32[72,128]{1,0:T(1,128)}', space=vmem, size = 0x9000, scoped, tag = 'internal scratch']
  %s0 = inlined_call_operand.hbm [shape: f32[72,200], index: 0, kind: input, shape index: {}]
  %s1 = inlined_call_operand.hbm [shape: bf16[72,200], index: 1, kind: input, shape index: {}]
  %s2 = inlined_call_operand.hbm [shape: f32[8,200], index: 2, kind: output, shape index: {}]
  %s3 = sld [smem:[#allocation0]]
  $region53: #{tpu_custom_call.1} parent=0
    _
  %s5 = ssub.s32 1, %s3
  %s6 = scalar_select 0, %s5, %s3
  $region1: #{tpu_custom_call.1} parent=0
    #allocation2 [shape = 'u8[131072]{0}', space=vmem, size = 0x20000, scoped, tag = 'input window, operand 0']
    #allocation3 [shape = 's32[2]{0}', space=sflag, size = 0x8, scoped, tag = 'scoped memory for tpu_custom_call.1']
    #allocation4 [shape = 's32[2]{0}', space=sflag, size = 0x8, scoped, tag = 'scoped memory for tpu_custom_call.1']
    #allocation5 [shape = 'u8[65536]{0}', space=vmem, size = 0x10000, scoped, tag = 'input window, operand 1']
    #allocation6 [shape = 's32[2]{0}', space=sflag, size = 0x8, scoped, tag = 'scoped memory for tpu_custom_call.1']
    #allocation7 [shape = 'u8[8192]{0}', space=vmem, size = 0x2000, scoped, tag = 'output window, operand 0, single buffered']
    %7 = vsyncpa [#allocation3], 0
    %s8 = scalar_lea.sflag [#allocation3], 1
    %9 = vsyncpa %s8, 0
    %10 = vsyncpa [#allocation6], 0
    %s11 = scalar_lea.sflag [#allocation6], 1
    %12 = vsyncpa %s11, 0
    %13 = vsyncpa [#allocation4], 0
    loop: start=0, step=1, limit=4
    $region2: #{tpu_custom_call.1} parent=1 // loop_pre_header
      _
    $region3: #{tpu_custom_call.1} parent=1 // loop_header
      %s15 = sphi 0, %s19
      %p16 = scmp.ge.s32.totalorder %s15, 4
      %s22 = sphi 0, %s34
      %s23 = sphi 0, %s30
      %s24 = sphi 0, %s22
      %s25 = sphi 0, %s23
      %s26 = sphi 0, %s24
      %s27 = sphi 0, %s25
      %s45 = sphi 0, %s47
      %s48 = sphi 0, %s45
      %s49 = sphi 0, %s48
      %s65 = sphi 0, %s49
      %s79 = sphi 0, %s81
      %s82 = sphi 0, %s79
      %s83 = sphi 0, %s82
      %s99 = sphi 0, %s83
      %s105 = sphi 0, %s107
      %s108 = sphi 0, %s105
      %s109 = sphi 0, %s108
      %s125 = sphi 0, %s109
    $region4: #{tpu_custom_call.1} parent=1 // loop_header_branch
      %18 = sbr.rel (%p16) target = $region8
    $region5: #{tpu_custom_call.1} parent=1 // loop_body
      %s20 = ssub.s32 %s15, 1
      %s21 = ssub.s32 %s15, 2
      %s28 = sadd.s32 1, %s23
      %p29 = scmp.ge.s32.totalorder %s28, 2
      %s30 = scalar_select %p29, 0, %s28
      %s31 = sadd.s32 1, %s22
      %s32 = scalar_select %p29, %s31, %s22
      %p33 = scmp.ge.s32.totalorder %s32, 1
      %s34 = scalar_select %p33, 0, %s32
      %s35 = smul.u32 %s22, 2
      %s36 = sadd.s32 %s35, %s23
      %p37 = scmp.lt.s32.totalorder %s36, 1
      %s38 = scalar_select %p37, %s36, 1
      %s39 = smul.u32 %s34, 2
      %s40 = sadd.s32 %s39, %s30
      %p41 = scmp.lt.s32.totalorder %s40, 1
      %s42 = scalar_select %p41, %s40, 1
      %s43 = ssub.s32 %s38, %s42
      %p44 = scmp.eq.s32.totalorder %s43, 0
      %s46 = sadd.s32 %s45, 1
      %s47 = scalar_select %p44, %s45, %s46
      %p50 = pneg %p44
      %p51 = scmp.eq.s32.totalorder %s15, 1
      %p52 = por %p50, %p51
      %p53 = scmp.ne.s32.totalorder %s45, %s48
      %p54 = scmp.eq.s32.totalorder %s15, 0
      %p55 = por %p53, %p54
      %p56 = scmp.ne.s32.totalorder %s45, %s48
      %p57 = scmp.eq.s32.totalorder %s20, 1
      %p58 = por %p56, %p57
      %p59 = scmp.ne.s32.totalorder %s48, %s49
      %p60 = scmp.eq.s32.totalorder %s20, 0
      %p61 = por %p59, %p60
      %p62 = scmp.ne.s32.totalorder %s48, %s49
      %p63 = scmp.eq.s32.totalorder %s21, 1
      %p64 = por %p62, %p63
      %p66 = scmp.ne.s32.totalorder %s49, %s65
      %p67 = scmp.eq.s32.totalorder %s21, 0
      %p68 = por %p66, %p67
      %s69 = smul.u32 %s22, 2
      %s70 = sadd.s32 %s69, %s23
      %p71 = scmp.lt.s32.totalorder %s70, 1
      %s72 = scalar_select %p71, %s70, 1
      %s73 = smul.u32 %s34, 2
      %s74 = sadd.s32 %s73, %s30
      %p75 = scmp.lt.s32.totalorder %s74, 1
      %s76 = scalar_select %p75, %s74, 1
      %s77 = ssub.s32 %s72, %s76
      %p78 = scmp.eq.s32.totalorder %s77, 0
      %s80 = sadd.s32 %s79, 1
      %s81 = scalar_select %p78, %s79, %s80
      %p84 = pneg %p78
      %p85 = scmp.eq.s32.totalorder %s15, 1
      %p86 = por %p84, %p85
      %p87 = scmp.ne.s32.totalorder %s79, %s82
      %p88 = scmp.eq.s32.totalorder %s15, 0
      %p89 = por %p87, %p88
      %p90 = scmp.ne.s32.totalorder %s79, %s82
      %p91 = scmp.eq.s32.totalorder %s20, 1
      %p92 = por %p90, %p91
      %p93 = scmp.ne.s32.totalorder %s82, %s83
      %p94 = scmp.eq.s32.totalorder %s20, 0
      %p95 = por %p93, %p94
      %p96 = scmp.ne.s32.totalorder %s82, %s83
      %p97 = scmp.eq.s32.totalorder %s21, 1
      %p98 = por %p96, %p97
      %p100 = scmp.ne.s32.totalorder %s83, %s99
      %p101 = scmp.eq.s32.totalorder %s21, 0
      %p102 = por %p100, %p101
      %s103 = ssub.s32 %s22, %s34
      %p104 = scmp.eq.s32.totalorder %s103, 0
      %s106 = sadd.s32 %s105, 1
      %s107 = scalar_select %p104, %s105, %s106
      %p110 = pneg %p104
      %p111 = scmp.eq.s32.totalorder %s15, 1
      %p112 = por %p110, %p111
      %p113 = scmp.ne.s32.totalorder %s105, %s108
      %p114 = scmp.eq.s32.totalorder %s15, 0
      %p115 = por %p113, %p114
      %p116 = scmp.ne.s32.totalorder %s105, %s108
      %p117 = scmp.eq.s32.totalorder %s20, 1
      %p118 = por %p116, %p117
      %p119 = scmp.ne.s32.totalorder %s108, %s109
      %p120 = scmp.eq.s32.totalorder %s20, 0
      %p121 = por %p119, %p120
      %p122 = scmp.ne.s32.totalorder %s108, %s109
      %p123 = scmp.eq.s32.totalorder %s21, 1
      %p124 = por %p122, %p123
      %p126 = scmp.ne.s32.totalorder %s109, %s125
      %p127 = scmp.eq.s32.totalorder %s21, 0
      %p128 = por %p126, %p127
      %p129 = scmp.le.s32.totalorder 1, %s15
      %p130 = scmp.lt.s32.totalorder %s15, 3
      %p131 = pnand %p129, %p130
      %p132 = pneg %p131
      // Predicated region
      $region9: #{tpu_custom_call.1} parent=5 // pred_check
        _
      $region10: #{tpu_custom_call.1} parent=5 // pred_check_branch
        %134 = sbr.rel (%p131) target = $region12
      $region11: #{tpu_custom_call.1} parent=5 // pred_region
        %s135 = ssub.s32 %s15, 1
      $region12: #{tpu_custom_call.1} parent=5 // pred_fallthru
        _
      %p136 = scmp.lt.s32.totalorder %s15, 2
      // Predicated region
      $region13: #{tpu_custom_call.1} parent=5 // pred_check
        %p137 = pneg %p136
      $region14: #{tpu_custom_call.1} parent=5 // pred_check_branch
        %139 = sbr.rel (%p137) target = $region16
      $region15: #{tpu_custom_call.1} parent=5 // pred_region
        // Predicated region
        $region17: #{tpu_custom_call.1} parent=15 // pred_check
          %p140 = pneg %p55
        $region18: #{tpu_custom_call.1} parent=15 // pred_check_branch
          %142 = sbr.rel (%p140) target = $region20
        $region19: #{tpu_custom_call.1} parent=15 // pred_region
          %s143 = sand.u32 %s45, 1
          %s144 = scalar_lea.sflag [#allocation3], %s143
          %s145 = sand.u32 %s45, 1
          %s146 = smul.addr %s145, 128
          %s147 = scalar_lea.vmem [#allocation2], %s146
          %s148 = smul.u32 %s22, 2
          %s149 = sadd.s32 %s148, %s23
          %p150 = scmp.lt.s32.totalorder %s149, 1
          %s151 = scalar_select %p150, %s149, 1
          %s152 = smul.u32 8, %s151
          %s153 = ssub.s32 9, %s152
          %p154 = scmp.lt.s32.totalorder %s153, 8
          %s155 = scalar_select %p154, %s153, 8
          %s156 = smul.u32 8, %s155
          %s157 = smul.u32 %s156, 2
          %s158 = ssub.s32 128, %s157
          %s159 = sshll.u32 %s158, 4
          %160 = vsyncadd %s144, %s159
          %p161 = scmp.ne.s32.totalorder 0, %s157
          %s162 = smul.addr %s152, 2
          %s163 = smul.addr %s162, 8
          %s164 = scalar_lea.hbm %s0, %s163
          %s165 = smul.u32 16, %s155
          %s166 = sshll.u32 %s164, 4
          %s167 = int_to_ptr.hbm [resolvable:$true] %s166
          %s168 = sshll.u32 %s147, 4
          %s169 = int_to_ptr.vmem [resolvable:$true] %s168
          %s170 = sshll.u32 %s165, 4
          %174 = dma.hbm_to_vmem [thread:$0]  (%p161), %s167, %s170, %s169, %s144, 256, 256, 16
        $region20: #{tpu_custom_call.1} parent=15 // pred_fallthru
          _
        // Predicated region
        $region21: #{tpu_custom_call.1} parent=15 // pred_check
          %p175 = pneg %p89
        $region22: #{tpu_custom_call.1} parent=15 // pred_check_branch
          %177 = sbr.rel (%p175) target = $region24
        $region23: #{tpu_custom_call.1} parent=15 // pred_region
          %s178 = sand.u32 %s79, 1
          %s179 = scalar_lea.sflag [#allocation6], %s178
          %s180 = sand.u32 %s79, 1
          %s181 = smul.addr %s180, 64
          %s182 = scalar_lea.vmem [#allocation5], %s181
          %s183 = smul.u32 %s22, 2
          %s184 = sadd.s32 %s183, %s23
          %p185 = scmp.lt.s32.totalorder %s184, 1
          %s186 = scalar_select %p185, %s184, 1
          %s187 = smul.u32 8, %s186
          %s188 = ssub.s32 9, %s187
          %p189 = scmp.lt.s32.totalorder %s188, 8
          %s190 = scalar_select %p189, %s188, 8
          %s191 = smul.u32 4, %s190
          %s192 = smul.u32 %s191, 2
          %s193 = ssub.s32 64, %s192
          %s194 = sshll.u32 %s193, 4
          %195 = vsyncadd %s179, %s194
          %p196 = scmp.ne.s32.totalorder 0, %s192
          %s197 = smul.addr %s187, 2
          %s198 = smul.addr %s197, 4
          %s199 = scalar_lea.hbm %s1, %s198
          %s200 = smul.u32 8, %s190
          %s201 = sshll.u32 %s199, 4
          %s202 = int_to_ptr.hbm [resolvable:$true] %s201
          %s203 = sshll.u32 %s182, 4
          %s204 = int_to_ptr.vmem [resolvable:$true] %s203
          %s205 = sshll.u32 %s200, 4
          %209 = dma.hbm_to_vmem [thread:$0]  (%p196), %s202, %s205, %s204, %s179, 128, 128, 8
        $region24: #{tpu_custom_call.1} parent=15 // pred_fallthru
          _
      $region16: #{tpu_custom_call.1} parent=5 // pred_fallthru
        _
      %p210 = scmp.le.s32.totalorder 1, %s15
      %p211 = scmp.lt.s32.totalorder %s15, 3
      %p212 = pnand %p210, %p211
      %p213 = pneg %p212
      // Predicated region
      $region25: #{tpu_custom_call.1} parent=5 // pred_check
        _
      $region26: #{tpu_custom_call.1} parent=5 // pred_check_branch
        %215 = sbr.rel (%p212) target = $region28
      $region27: #{tpu_custom_call.1} parent=5 // pred_region
        %s216 = ssub.s32 %s15, 1
        %s217 = sand.u32 %s48, 1
        %s218 = scalar_lea.sflag [#allocation3], %s217
        %s219 = sand.u32 %s48, 1
        %s220 = smul.addr %s219, 128
        %s221 = scalar_lea.vmem [#allocation2], %s220
        // Predicated region
        $region29: #{tpu_custom_call.1} parent=27 // pred_check
          %p222 = pneg %p61
        $region30: #{tpu_custom_call.1} parent=27 // pred_check_branch
          %224 = sbr.rel (%p222) target = $region32
        $region31: #{tpu_custom_call.1} parent=27 // pred_region
          %226 = dma.done %s218, 2048
        $region32: #{tpu_custom_call.1} parent=27 // pred_fallthru
          _
        %s227 = sand.u32 %s82, 1
        %s228 = scalar_lea.sflag [#allocation6], %s227
        %s229 = sand.u32 %s82, 1
        %s230 = smul.addr %s229, 64
        %s231 = scalar_lea.vmem [#allocation5], %s230
        // Predicated region
        $region33: #{tpu_custom_call.1} parent=27 // pred_check
          %p232 = pneg %p95
        $region34: #{tpu_custom_call.1} parent=27 // pred_check_branch
          %234 = sbr.rel (%p232) target = $region36
        $region35: #{tpu_custom_call.1} parent=27 // pred_region
          %236 = dma.done %s228, 1024
        $region36: #{tpu_custom_call.1} parent=27 // pred_fallthru
          _
        %s237 = sand.u32 %s48, 1
        %s238 = scalar_lea.sflag [#allocation3], %s237
        %s239 = sand.u32 %s48, 1
        %s240 = smul.addr %s239, 128
        %s241 = scalar_lea.vmem [#allocation2], %s240
        %p242 = pneg %p61
        %p243 = pneg %p58
        %s244 = sand.u32 %s82, 1
        %s245 = scalar_lea.sflag [#allocation6], %s244
        %s246 = sand.u32 %s82, 1
        %s247 = smul.addr %s246, 64
        %s248 = scalar_lea.vmem [#allocation5], %s247
        %p249 = pneg %p95
        %p250 = pneg %p92
        %p251 = pneg %p121
        %p252 = pneg %p118
        %s253 = smul.u32 %s24, 2
        %s254 = sadd.s32 %s253, %s25
        %p255 = scmp.lt.s32.totalorder %s254, 1
        %s256 = scalar_select %p255, %s254, 1
        %s257 = smul.u32 8, %s256
        %s258 = ssub.s32 9, %s257
        %p259 = scmp.lt.s32.totalorder %s258, 8
        %s260 = scalar_select %p259, %s258, 8
        %s261 = smul.u32 8, %s260
        %s262 = smul.u32 %s261, 2
        %s263 = smul.u32 %s24, 2
        %s264 = sadd.s32 %s263, %s25
        %p265 = scmp.lt.s32.totalorder %s264, 1
        %s266 = scalar_select %p265, %s264, 1
        %s267 = smul.u32 8, %s266
        %s268 = ssub.s32 9, %s267
        %p269 = scmp.lt.s32.totalorder %s268, 8
        %s270 = scalar_select %p269, %s268, 8
        %s271 = smul.u32 4, %s270
        %s272 = smul.u32 %s271, 2
        %v273 = vld [vmem:[%s221] sm:$0xff]
        %v274 = vld [vmem:[%s221 + $0x8] sm:$0xff]
        %v275 = vld [vmem:[%s221 + $0x10] sm:$0xff]
        %v276 = vld [vmem:[%s221 + $0x18] sm:$0xff]
        %v277 = vld [vmem:[%s221 + $0x20] sm:$0xff]
        %v278 = vld [vmem:[%s221 + $0x28] sm:$0xff]
        %v279 = vld [vmem:[%s221 + $0x30] sm:$0xff]
        %v280 = vld [vmem:[%s221 + $0x38] sm:$0xff]
        %v281 = vld [vmem:[%s221 + $0x40] sm:$0xff]
        %v282 = vld [vmem:[%s221 + $0x48] sm:$0xff]
        %v283 = vld [vmem:[%s221 + $0x50] sm:$0xff]
        %v284 = vld [vmem:[%s221 + $0x58] sm:$0xff]
        %v285 = vld [vmem:[%s221 + $0x60] sm:$0xff]
        %v286 = vld [vmem:[%s221 + $0x68] sm:$0xff]
        %v287 = vld [vmem:[%s221 + $0x70] sm:$0xff]
        %v288 = vld [vmem:[%s221 + $0x78] sm:$0xff]
        %v289 = vld [vmem:[%s231] sm:$0xff]
        %v290 = vld [vmem:[%s231 + $0x8] sm:$0xff]
        %v291 = vld [vmem:[%s231 + $0x10] sm:$0xff]
        %v292 = vld [vmem:[%s231 + $0x18] sm:$0xff]
        %v293 = vld [vmem:[%s231 + $0x20] sm:$0xff]
        %v294 = vld [vmem:[%s231 + $0x28] sm:$0xff]
        %v295 = vld [vmem:[%s231 + $0x30] sm:$0xff]
        %v296 = vld [vmem:[%s231 + $0x38] sm:$0xff]
        %v297 = vunpack.c.l.bf16 %v289
        %v298 = vunpack.c.h.bf16 %v289
        %v299 = vunpack.c.l.bf16 %v290
        %v300 = vunpack.c.h.bf16 %v290
        %v301 = vunpack.c.l.bf16 %v291
        %v302 = vunpack.c.h.bf16 %v291
        %v303 = vunpack.c.l.bf16 %v292
        %v304 = vunpack.c.h.bf16 %v292
        %v305 = vunpack.c.l.bf16 %v293
        %v306 = vunpack.c.h.bf16 %v293
        %v307 = vunpack.c.l.bf16 %v294
        %v308 = vunpack.c.h.bf16 %v294
        %v309 = vunpack.c.l.bf16 %v295
        %v310 = vunpack.c.h.bf16 %v295
        %v311 = vunpack.c.l.bf16 %v296
        %v312 = vunpack.c.h.bf16 %v296
        %v313 = vsub.f32 %v273, %v297
        %v314 = vsub.f32 %v274, %v298
        %v315 = vsub.f32 %v275, %v299
        %v316 = vsub.f32 %v276, %v300
        %v317 = vsub.f32 %v277, %v301
        %v318 = vsub.f32 %v278, %v302
        %v319 = vsub.f32 %v279, %v303
        %v320 = vsub.f32 %v280, %v304
        %v321 = vsub.f32 %v281, %v305
        %v322 = vsub.f32 %v282, %v306
        %v323 = vsub.f32 %v283, %v307
        %v324 = vsub.f32 %v284, %v308
        %v325 = vsub.f32 %v285, %v309
        %v326 = vsub.f32 %v286, %v310
        %v327 = vsub.f32 %v287, %v311
        %v328 = vsub.f32 %v288, %v312
        %v329 = vmul.f32 %v297, 0.6
        %v330 = vmul.f32 %v298, 0.6
        %v331 = vmul.f32 %v299, 0.6
        %v332 = vmul.f32 %v300, 0.6
        %v333 = vmul.f32 %v301, 0.6
        %v334 = vmul.f32 %v302, 0.6
        %v335 = vmul.f32 %v303, 0.6
        %v336 = vmul.f32 %v304, 0.6
        %v337 = vmul.f32 %v305, 0.6
        %v338 = vmul.f32 %v306, 0.6
        %v339 = vmul.f32 %v307, 0.6
        %v340 = vmul.f32 %v308, 0.6
        %v341 = vmul.f32 %v309, 0.6
        %v342 = vmul.f32 %v310, 0.6
        %v343 = vmul.f32 %v311, 0.6
        %v344 = vmul.f32 %v312, 0.6
        %v345 = vadd.f32 %v329, 0.2
        %v346 = vadd.f32 %v330, 0.2
        %v347 = vadd.f32 %v331, 0.2
        %v348 = vadd.f32 %v332, 0.2
        %v349 = vadd.f32 %v333, 0.2
        %v350 = vadd.f32 %v334, 0.2
        %v351 = vadd.f32 %v335, 0.2
        %v352 = vadd.f32 %v336, 0.2
        %v353 = vadd.f32 %v337, 0.2
        %v354 = vadd.f32 %v338, 0.2
        %v355 = vadd.f32 %v339, 0.2
        %v356 = vadd.f32 %v340, 0.2
        %v357 = vadd.f32 %v341, 0.2
        %v358 = vadd.f32 %v342, 0.2
        %v359 = vadd.f32 %v343, 0.2
        %v360 = vadd.f32 %v344, 0.2
        %v361 = vmul.f32 %v345, %v313
        %v362 = vmul.f32 %v346, %v314
        %v363 = vmul.f32 %v347, %v315
        %v364 = vmul.f32 %v348, %v316
        %v365 = vmul.f32 %v349, %v317
        %v366 = vmul.f32 %v350, %v318
        %v367 = vmul.f32 %v351, %v319
        %v368 = vmul.f32 %v352, %v320
        %v369 = vmul.f32 %v353, %v321
        %v370 = vmul.f32 %v354, %v322
        %v371 = vmul.f32 %v355, %v323
        %v372 = vmul.f32 %v356, %v324
        %v373 = vmul.f32 %v357, %v325
        %v374 = vmul.f32 %v358, %v326
        %v375 = vmul.f32 %v359, %v327
        %v376 = vmul.f32 %v360, %v328
        %v377 = vmul.f32 %v361, %v313
        %v378 = vmul.f32 %v362, %v314
        %v379 = vmul.f32 %v363, %v315
        %v380 = vmul.f32 %v364, %v316
        %v381 = vmul.f32 %v365, %v317
        %v382 = vmul.f32 %v366, %v318
        %v383 = vmul.f32 %v367, %v319
        %v384 = vmul.f32 %v368, %v320
        %v385 = vmul.f32 %v369, %v321
        %v386 = vmul.f32 %v370, %v322
        %v387 = vmul.f32 %v371, %v323
        %v388 = vmul.f32 %v372, %v324
        %v389 = vmul.f32 %v373, %v325
        %v390 = vmul.f32 %v374, %v326
        %v391 = vmul.f32 %v375, %v327
        %v392 = vmul.f32 %v376, %v328
        %p393 = scmp.eq.s32.totalorder %s25, 0
        // Predicated region
        $region37: #{tpu_custom_call.1} parent=27 // pred_check
          %p394 = pneg %p393
        $region38: #{tpu_custom_call.1} parent=27 // pred_check_branch
          %396 = sbr.rel (%p394) target = $region40
        $region39: #{tpu_custom_call.1} parent=27 // pred_region
          %397 = vst [vmem:[#allocation7] sm:$0xff] 0.0
          %vm398 = vcmask 588800
          %399 = vst.msk [vmem:[#allocation7 + $0x8] sm:$0xff] %vm398, 0.0
        $region40: #{tpu_custom_call.1} parent=27 // pred_fallthru
          _
        %s400 = smul.u32 %s24, 2
        %s401 = sadd.s32 %s400, %s25
        %s402 = smul.u32 %s401, 64
        %v403 = vlaneseq
        %v404 = vshrl.u32 %v403, 7
        %v405 = vadd.s32 %v404, 8
        %v406 = vadd.s32 %v404, 16
        %v407 = vadd.s32 %v404, 24
        %v408 = vadd.s32 %v404, 32
        %v409 = vadd.s32 %v404, 40
        %v410 = vadd.s32 %v404, 48
        %v411 = vadd.s32 %v404, 56
        %v412 = vstv %s402
        %v413 = vadd.s32 %v404, %v412
        %v414 = vadd.s32 %v405, %v412
        %v415 = vadd.s32 %v406, %v412
        %v416 = vadd.s32 %v407, %v412
        %v417 = vadd.s32 %v408, %v412
        %v418 = vadd.s32 %v409, %v412
        %v419 = vadd.s32 %v410, %v412
        %v420 = vadd.s32 %v411, %v412
        %vm421 = vcmp.lt.s32.totalorder %v413, 72
        %vm422 = vcmp.lt.s32.totalorder %v414, 72
        %vm423 = vcmp.lt.s32.totalorder %v415, 72
        %vm424 = vcmp.lt.s32.totalorder %v416, 72
        %vm425 = vcmp.lt.s32.totalorder %v417, 72
        %vm426 = vcmp.lt.s32.totalorder %v418, 72
        %vm427 = vcmp.lt.s32.totalorder %v419, 72
        %vm428 = vcmp.lt.s32.totalorder %v420, 72
        %v429 = vsel %vm421, 1, 0
        %v430 = vsel %vm422, 1, 0
        %v431 = vsel %vm423, 1, 0
        %v432 = vsel %vm424, 1, 0
        %v433 = vsel %vm425, 1, 0
        %v434 = vsel %vm426, 1, 0
        %v435 = vsel %vm427, 1, 0
        %v436 = vsel %vm428, 1, 0
        %vm437 = vcmp.eq.s32.totalorder %v429, 1
        %vm438 = vcmp.eq.s32.totalorder %v430, 1
        %vm439 = vcmp.eq.s32.totalorder %v431, 1
        %vm440 = vcmp.eq.s32.totalorder %v432, 1
        %vm441 = vcmp.eq.s32.totalorder %v433, 1
        %vm442 = vcmp.eq.s32.totalorder %v434, 1
        %vm443 = vcmp.eq.s32.totalorder %v435, 1
        %vm444 = vcmp.eq.s32.totalorder %v436, 1
        %v445 = vsel %vm437, %v377, 0.0
        %v446 = vsel %vm437, %v378, 0.0
        %v447 = vsel %vm438, %v379, 0.0
        %v448 = vsel %vm438, %v380, 0.0
        %v449 = vsel %vm439, %v381, 0.0
        %v450 = vsel %vm439, %v382, 0.0
        %v451 = vsel %vm440, %v383, 0.0
        %v452 = vsel %vm440, %v384, 0.0
        %v453 = vsel %vm441, %v385, 0.0
        %v454 = vsel %vm441, %v386, 0.0
        %v455 = vsel %vm442, %v387, 0.0
        %v456 = vsel %vm442, %v388, 0.0
        %v457 = vsel %vm443, %v389, 0.0
        %v458 = vsel %vm443, %v390, 0.0
        %v459 = vsel %vm444, %v391, 0.0
        %v460 = vsel %vm444, %v392, 0.0
        %v461 = vadd.f32 %v445, %v447
        %v462 = vadd.f32 %v446, %v448
        %v463 = vadd.f32 %v449, %v451
        %v464 = vadd.f32 %v450, %v452
        %v465 = vadd.f32 %v453, %v455
        %v466 = vadd.f32 %v454, %v456
        %v467 = vadd.f32 %v457, %v459
        %v468 = vadd.f32 %v458, %v460
        %v469 = vadd.f32 %v461, %v463
        %v470 = vadd.f32 %v462, %v464
        %v471 = vadd.f32 %v465, %v467
        %v472 = vadd.f32 %v466, %v468
        %v473 = vadd.f32 %v469, %v471
        %v474 = vadd.f32 %v470, %v472
        %v475 = vld [vmem:[#allocation7] sm:$0xff]
        %v476 = vld [vmem:[#allocation7 + $0x8] sm:$0xff]
        %v477 = vadd.f32 %v475, %v473
        %v478 = vadd.f32 %v476, %v474
        %479 = vst [vmem:[#allocation7] sm:$0xff] %v477
        %vm480 = vcmask 588800
        %481 = vst.msk [vmem:[#allocation7 + $0x8] sm:$0xff] %vm480, %v478
        // Predicated region
        $region41: #{tpu_custom_call.1} parent=27 // pred_check
          %p482 = pneg %p118
        $region42: #{tpu_custom_call.1} parent=27 // pred_check_branch
          %484 = sbr.rel (%p482) target = $region44
        $region43: #{tpu_custom_call.1} parent=27 // pred_region
          %486 = vsyncadd [#allocation4], 0
          %s487 = smul.addr %s24, 2
          %s488 = smul.addr %s487, 8
          %s489 = scalar_lea.hbm %s2, %s488
          %s491 = sshll.u32 [#allocation7], 4
          %s492 = int_to_ptr.vmem [resolvable:$true] %s491
          %s493 = sshll.u32 %s489, 4
          %s494 = int_to_ptr.hbm [resolvable:$true] %s493
          %496 = dma.vmem_to_hbm [thread:$0]  %s492, 256, %s494, [#allocation4]
        $region44: #{tpu_custom_call.1} parent=27 // pred_fallthru
          _
        // Predicated region
        $region45: #{tpu_custom_call.1} parent=27 // pred_check
          %p497 = pneg %p118
        $region46: #{tpu_custom_call.1} parent=27 // pred_check_branch
          %499 = sbr.rel (%p497) target = $region48
        $region47: #{tpu_custom_call.1} parent=27 // pred_region
          %501 = dma.done [#allocation4], 256
        $region48: #{tpu_custom_call.1} parent=27 // pred_fallthru
          _
      $region28: #{tpu_custom_call.1} parent=5 // pred_fallthru
        _
      %p502 = scmp.le.s32.totalorder 2, %s15
      // Predicated region
      $region49: #{tpu_custom_call.1} parent=5 // pred_check
        %p503 = pneg %p502
      $region50: #{tpu_custom_call.1} parent=5 // pred_check_branch
        %505 = sbr.rel (%p503) target = $region52
      $region51: #{tpu_custom_call.1} parent=5 // pred_region
        %s506 = ssub.s32 %s15, 2
      $region52: #{tpu_custom_call.1} parent=5 // pred_fallthru
        _
    $region6: #{tpu_custom_call.1} parent=1 // loop_footer
      %s19 = sadd.s32 1, %s15
    $region7: #{tpu_custom_call.1} parent=1 // loop_footer_branch
      %14 = sbr.rel target = $region3
    $region8: #{tpu_custom_call.1} parent=1 // loop_exit
      _
    %507 = vsyncpa [#allocation3], 1
    %s508 = scalar_lea.sflag [#allocation3], 1
    %509 = vsyncpa %s508, 1
    %510 = vsyncpa [#allocation6], 1
    %s511 = scalar_lea.sflag [#allocation6], 1
    %512 = vsyncpa %s511, 1
    %513 = vsyncpa [#allocation4], 1
    %s514 = scalar_lea.sflag [#allocation4], 1
    %515 = vsyncpa %s514, 1

</llo_original>
